<compile_context>
chip_gen: v7x
topology: tpu7x:2x2x1
jax: 0.10.0
libtpu: 0.0.40
codegen_flags: <defaults>
</compile_context>

<pallas_src>
from typing import Dict, List, Tuple

import numpy as np
import jax
import jax.numpy as jnp
from jax import lax
from jax.experimental import pallas as pl
from jax.experimental.pallas import tpu as pltpu


LANE = 128     # last-dim (lane) padding
SUBLANE = 8    # row (sublane) padding


def _rup(n: int, m: int) -> int:
    return ((n + m - 1) // m) * m


def _pad2(x, rows: int, cols: int):
    r, c = x.shape
    return jnp.pad(x, ((0, rows - r), (0, cols - c)))


def _vmem():
    return pl.BlockSpec(memory_space=pltpu.MemorySpace.VMEM)


# --------------------------- fused PinSAGE layer ---------------------------

def _sage_layer_kernel(x_ref, a_ref, sel_ref, wq_ref, bq_ref,
                       wes_ref, wen_ref, be_ref, o_ref):
    """One PinSAGE layer, fully fused.

    x_ref   : (S_p, Din_p) f32   source-node features (zero padded)
    a_ref   : (T_p, S_p)   bf16  row-normalized importance weights
    sel_ref : (T_p, S_p)   bf16  one-hot target -> source selection
    wq_ref  : (Din_p, Da_p) bf16 aggregator weight;  bq_ref (1, Da_p) f32
    wes_ref : (Din_p, Do_p) bf16 encoder weight (self rows)
    wen_ref : (Da_p,  Do_p) bf16 encoder weight (neighbor rows)
    be_ref  : (1, Do_p)     f32
    o_ref   : (T_p, Do_p)   f32  L2-normalized layer output
    """
    x = x_ref[...]
    xb = x.astype(jnp.bfloat16)

    # Aggregator: ReLU(x @ Wq + bq)   (MXU, f32 accumulation; epilogue in f32)
    h = jnp.dot(xb, wq_ref[...], preferred_element_type=jnp.float32)
    h = jnp.maximum(h + bq_ref[...], 0.0)

    # Importance-weighted neighbor mean: neighs = A @ h
    neighs = jnp.dot(a_ref[...], h.astype(jnp.bfloat16),
                     preferred_element_type=jnp.float32)

    # Self-feature gather folded into the kernel as a one-hot matmul.
    nodes = jnp.dot(sel_ref[...], xb, preferred_element_type=jnp.float32)

    # Encoder: ReLU(nodes @ We_self + neighs @ We_neigh + be)
    # (split weights -> no concat, no extra HBM intermediate)
    y = jnp.dot(nodes.astype(jnp.bfloat16), wes_ref[...],
                preferred_element_type=jnp.float32)
    y = y + jnp.dot(neighs.astype(jnp.bfloat16), wen_ref[...],
                    preferred_element_type=jnp.float32)
    y = jnp.maximum(y + be_ref[...], 0.0)

    # L2 normalize via rsqrt (EUP) instead of sqrt + divide (VALU).
    # Zero-padded columns of y are exactly 0, so the norm matches unpadded math.
    ss = jnp.sum(y * y, axis=-1, keepdims=True)
    y = y * lax.rsqrt(jnp.maximum(ss, 1e-24))
    o_ref[...] = y.astype(o_ref.dtype)


def sage_layer(feats, A, sel, wq, bq, wes, wen, be):
    t_p = A.shape[0]
    do_p = wes.shape[1]
    return pl.pallas_call(
        _sage_layer_kernel,
        out_shape=jax.ShapeDtypeStruct((t_p, do_p), jnp.float32),
        in_specs=[_vmem()] * 8,
        out_specs=_vmem(),
    )(feats, A, sel, wq, bq, wes, wen, be)


# --------------------------- fused classifier head -------------------------

def _head_kernel(h_ref, w1_ref, b1_ref, w2_ref, o_ref):
    hb = h_ref[...].astype(jnp.bfloat16)
    hid = jnp.dot(hb, w1_ref[...], preferred_element_type=jnp.float32)
    hid = jnp.maximum(hid + b1_ref[...], 0.0)
    o_ref[...] = jnp.dot(hid.astype(jnp.bfloat16), w2_ref[...],
                         preferred_element_type=jnp.float32).astype(o_ref.dtype)


def classifier_head(h, w1, b1, w2):
    t_p = h.shape[0]
    c_p = w2.shape[1]
    return pl.pallas_call(
        _head_kernel,
        out_shape=jax.ShapeDtypeStruct((t_p, c_p), jnp.float32),
        in_specs=[_vmem()] * 4,
        out_specs=_vmem(),
    )(h, w1, b1, w2)


# ------------------------------ parameter init -----------------------------

def _init_linear_padded(key, in_dim, out_dim, bias=True):
    """PyTorch nn.Linear init (bound = 1/sqrt(fan_in)); weight stored
    transposed (in, out), zero-padded to lane multiples and cast to bf16
    (MXU operand).  Bias stays f32."""
    kw, kb = jax.random.split(key)
    bound = 1.0 / (in_dim ** 0.5)
    w = jax.random.uniform(kw, (in_dim, out_dim), jnp.float32, -bound, bound)
    wp = _pad2(w, _rup(in_dim, LANE), _rup(out_dim, LANE)).astype(jnp.bfloat16)
    if not bias:
        return wp, None
    b = jax.random.uniform(kb, (out_dim,), jnp.float32, -bound, bound)
    bp = _pad2(b[None, :], 1, _rup(out_dim, LANE))
    return wp, bp


def _init_encoder_split(key, d_self, d_neigh, out_dim):
    """One nn.Linear(d_self + d_neigh, out_dim) split along its input rows
    into a self part and a neighbor part (removes the runtime concat)."""
    in_dim = d_self + d_neigh
    kw, kb = jax.random.split(key)
    bound = 1.0 / (in_dim ** 0.5)
    w = jax.random.uniform(kw, (in_dim, out_dim), jnp.float32, -bound, bound)
    b = jax.random.uniform(kb, (out_dim,), jnp.float32, -bound, bound)
    wes = _pad2(w[:d_self], _rup(d_self, LANE),
                _rup(out_dim, LANE)).astype(jnp.bfloat16)
    wen = _pad2(w[d_self:], _rup(d_neigh, LANE),
                _rup(out_dim, LANE)).astype(jnp.bfloat16)
    be = _pad2(b[None, :], 1, _rup(out_dim, LANE))
    return wes, wen, be


# ----------------------------------- model ---------------------------------

class NodeClassifierPallas:
    def __init__(self, num_classes, dims: List[int], k_layers=2,
                 output_dim=64, key=None):
        assert len(dims) == 4 * k_layers
        self.k_layers = k_layers
        self.dims = dims[:]
        self.num_classes = num_classes
        self.output_dim = output_dim
        keys = jax.random.split(key, 2 * k_layers + 2)
        self.layers = []
        for k in range(k_layers):
            d_in, d_agg, d_enc_in, d_enc_out = dims[4 * k: 4 * k + 4]
            assert d_enc_in == 2 * d_agg
            # NOTE: the concat (self ++ neighbors) has dim d_in + d_agg; the
            # module's own assertion only matches when d_in == d_agg.
            assert d_in == d_agg
            if k < k_layers - 1:
                assert d_enc_out == dims[4 * (k + 1)]
            wq, bq = _init_linear_padded(keys[2 * k], d_in, d_agg)
            wes, wen, be = _init_encoder_split(keys[2 * k + 1], d_in, d_agg,
                                               d_enc_out)
            self.layers.append((wq, bq, wes, wen, be))
        w1, b1 = _init_linear_padded(keys[-2], dims[-1], output_dim)
        w2, _ = _init_linear_padded(keys[-1], output_dim, num_classes,
                                    bias=False)
        self.head = (w1, b1, w2)

    def forward(self,
                batch_nodes: List[List[int]],
                batch_adjList: List[Dict[int, List[Tuple[int, float]]]],
                embedding_table: jnp.ndarray) -> jnp.ndarray:
        # Layer-0 features: embedding lookup for the outermost neighborhood,
        # zero-padded (rows -> x8 sublanes, feature dim -> x128 lanes).
        src_nodes = list(batch_nodes[0])
        idx = {u: i for i, u in enumerate(src_nodes)}
        s_p = _rup(len(src_nodes), SUBLANE)
        feats = embedding_table[np.asarray(src_nodes, dtype=np.int32)]
        feats = _pad2(feats.astype(jnp.float32), s_p,
                      _rup(feats.shape[1], LANE))

        for k in range(1, self.k_layers + 1):
            wq, bq, wes, wen, be = self.layers[k - 1]
            tgt_nodes = list(batch_nodes[k])
            t_p = _rup(len(tgt_nodes), SUBLANE)

            # Host-side graph bookkeeping (tiny): row-normalized importance
            # weights A and one-hot self-selection sel, both zero-padded.
            # TODO(synk): at scale, replace with a device-side scalar-prefetch
            # gather / segment-weighted-sum instead of dense host matrices.
            A = np.zeros((t_p, s_p), dtype=np.float32)
            sel = np.zeros((t_p, s_p), dtype=np.float32)
            for i, u in enumerate(tgt_nodes):
                sel[i, idx[u]] = 1.0
                for v, w in batch_adjList[k - 1][u]:
                    A[i, idx[v]] += float(w)
                s = A[i].sum()
                if s > 0.0:
                    A[i] /= s     # zero-degree rows stay all-zero (matches ref)

            feats = sage_layer(feats,
                               jnp.asarray(A, dtype=jnp.bfloat16),
                               jnp.asarray(sel, dtype=jnp.bfloat16),
                               wq, bq, wes, wen, be)

            src_nodes = tgt_nodes
            idx = {u: i for i, u in enumerate(src_nodes)}
            s_p = t_p

        # Rows of `feats` are already ordered as batch_nodes[-1]
        # (== batch_nodes[k_layers]), so no final gather is needed.
        w1, b1, w2 = self.head
        logits_p = classifier_head(feats, w1, b1, w2)
        return logits_p[:len(batch_nodes[-1]), :self.num_classes]


# ------------------------------------ demo ----------------------------------

if __name__ == "__main__":
    key = jax.random.PRNGKey(0)
    k_embed, k_model = jax.random.split(key)

    num_nodes = 12
    embed_dim = 16
    # dims layout: [agg0_in, agg0_out, enc0_in, enc0_out,
    #               agg1_in, agg1_out, enc1_in, enc1_out]
    dims = [16, 16, 32, 32, 32, 32, 64, 32]
    num_classes = 5
    output_dim = 64

    embedding_table = jax.random.normal(
        k_embed, (num_nodes, embed_dim), dtype=jnp.float32)

    # batch_nodes[0] ⊇ batch_nodes[1] ⊇ batch_nodes[2] (targets)
    batch_nodes = [list(range(12)), list(range(8)), list(range(4))]

    # Deterministic synthetic adjacency with importance weights.
    adj0 = {u: [((u + 1) % 12, 1.0), ((u + 3) % 12, 2.0), ((u + 5) % 12, 0.5)]
            for u in batch_nodes[1]}
    adj1 = {u: [((u + 1) % 8, 1.0), ((u + 2) % 8, 1.5)]
            for u in batch_nodes[2]}
    batch_adjList = [adj0, adj1]

    model = NodeClassifierPallas(num_classes, dims, k_layers=2,
                                 output_dim=output_dim, key=k_model)
    out = model.forward(batch_nodes, batch_adjList, embedding_table)
    out = jax.block_until_ready(out)

    assert out.shape == (len(batch_nodes[-1]), num_classes)
    assert out.dtype == jnp.float32
    assert bool(jnp.all(jnp.isfinite(out)))
    print("KERNEL_OK")
</pallas_src>

<mosaic_0001>
module attributes {stable_mosaic.version = 11 : i64} {
  func.func @_sage_layer_kernel(%arg0: memref<16x128xf32, #tpu.memory_space<vmem>>, %arg1: memref<8x16xbf16, #tpu.memory_space<vmem>>, %arg2: memref<8x16xbf16, #tpu.memory_space<vmem>>, %arg3: memref<128x128xbf16, #tpu.memory_space<vmem>>, %arg4: memref<1x128xf32, #tpu.memory_space<vmem>>, %arg5: memref<128x128xbf16, #tpu.memory_space<vmem>>, %arg6: memref<128x128xbf16, #tpu.memory_space<vmem>>, %arg7: memref<1x128xf32, #tpu.memory_space<vmem>>, %arg8: memref<8x128xf32, #tpu.memory_space<vmem>>) attributes {dimension_semantics = [], scalar_prefetch = 0 : i64, scratch_operands = 0 : i64, tpu.core_type = #tpu.core_type<tc>} {
    %c0 = arith.constant 0 : index
    %c0_0 = arith.constant 0 : index
    %0 = vector.load %arg0[%c0, %c0_0] : memref<16x128xf32, #tpu.memory_space<vmem>>, vector<16x128xf32>
    %1 = arith.truncf %0 : vector<16x128xf32> to vector<16x128xbf16>
    %c0_1 = arith.constant 0 : index
    %c0_2 = arith.constant 0 : index
    %2 = vector.load %arg3[%c0_1, %c0_2] : memref<128x128xbf16, #tpu.memory_space<vmem>>, vector<128x128xbf16>
    %cst = arith.constant dense<0.000000e+00> : vector<16x128xf32>
    %3 = tpu.matmul %1, %2, %cst {dimension_numbers = #tpu.dot_dimension_numbers<[1], [0], [0], [1], [0, 0, 1, 1], [], []>} : vector<16x128xbf16>, vector<128x128xbf16>, vector<16x128xf32> -> vector<16x128xf32>
    %c0_3 = arith.constant 0 : index
    %c0_4 = arith.constant 0 : index
    %4 = vector.load %arg4[%c0_3, %c0_4] : memref<1x128xf32, #tpu.memory_space<vmem>>, vector<1x128xf32>
    %5 = vector.broadcast %4 : vector<1x128xf32> to vector<16x128xf32>
    %6 = arith.addf %3, %5 : vector<16x128xf32>
    %cst_5 = arith.constant 0.000000e+00 : f32
    %7 = vector.broadcast %cst_5 : f32 to vector<16x128xf32>
    %8 = arith.maximumf %6, %7 : vector<16x128xf32>
    %c0_6 = arith.constant 0 : index
    %c0_7 = arith.constant 0 : index
    %9 = vector.load %arg1[%c0_6, %c0_7] : memref<8x16xbf16, #tpu.memory_space<vmem>>, vector<8x16xbf16>
    %10 = arith.truncf %8 : vector<16x128xf32> to vector<16x128xbf16>
    %cst_8 = arith.constant dense<0.000000e+00> : vector<8x128xf32>
    %11 = tpu.matmul %9, %10, %cst_8 {dimension_numbers = #tpu.dot_dimension_numbers<[1], [0], [0], [1], [0, 0, 1, 1], [], []>} : vector<8x16xbf16>, vector<16x128xbf16>, vector<8x128xf32> -> vector<8x128xf32>
    %c0_9 = arith.constant 0 : index
    %c0_10 = arith.constant 0 : index
    %12 = vector.load %arg2[%c0_9, %c0_10] : memref<8x16xbf16, #tpu.memory_space<vmem>>, vector<8x16xbf16>
    %cst_11 = arith.constant dense<0.000000e+00> : vector<8x128xf32>
    %13 = tpu.matmul %12, %1, %cst_11 {dimension_numbers = #tpu.dot_dimension_numbers<[1], [0], [0], [1], [0, 0, 1, 1], [], []>} : vector<8x16xbf16>, vector<16x128xbf16>, vector<8x128xf32> -> vector<8x128xf32>
    %14 = arith.truncf %13 : vector<8x128xf32> to vector<8x128xbf16>
    %c0_12 = arith.constant 0 : index
    %c0_13 = arith.constant 0 : index
    %15 = vector.load %arg5[%c0_12, %c0_13] : memref<128x128xbf16, #tpu.memory_space<vmem>>, vector<128x128xbf16>
    %cst_14 = arith.constant dense<0.000000e+00> : vector<8x128xf32>
    %16 = tpu.matmul %14, %15, %cst_14 {dimension_numbers = #tpu.dot_dimension_numbers<[1], [0], [0], [1], [0, 0, 1, 1], [], []>} : vector<8x128xbf16>, vector<128x128xbf16>, vector<8x128xf32> -> vector<8x128xf32>
    %17 = arith.truncf %11 : vector<8x128xf32> to vector<8x128xbf16>
    %c0_15 = arith.constant 0 : index
    %c0_16 = arith.constant 0 : index
    %18 = vector.load %arg6[%c0_15, %c0_16] : memref<128x128xbf16, #tpu.memory_space<vmem>>, vector<128x128xbf16>
    %cst_17 = arith.constant dense<0.000000e+00> : vector<8x128xf32>
    %19 = tpu.matmul %17, %18, %cst_17 {dimension_numbers = #tpu.dot_dimension_numbers<[1], [0], [0], [1], [0, 0, 1, 1], [], []>} : vector<8x128xbf16>, vector<128x128xbf16>, vector<8x128xf32> -> vector<8x128xf32>
    %20 = arith.addf %16, %19 : vector<8x128xf32>
    %c0_18 = arith.constant 0 : index
    %c0_19 = arith.constant 0 : index
    %21 = vector.load %arg7[%c0_18, %c0_19] : memref<1x128xf32, #tpu.memory_space<vmem>>, vector<1x128xf32>
    %22 = vector.broadcast %21 : vector<1x128xf32> to vector<8x128xf32>
    %23 = arith.addf %20, %22 : vector<8x128xf32>
    %cst_20 = arith.constant 0.000000e+00 : f32
    %24 = vector.broadcast %cst_20 : f32 to vector<8x128xf32>
    %25 = arith.maximumf %23, %24 : vector<8x128xf32>
    %26 = arith.mulf %25, %25 : vector<8x128xf32>
    %cst_21 = arith.constant dense<0.000000e+00> : vector<8xf32>
    %27 = vector.multi_reduction <add>, %26, %cst_21 [1] : vector<8x128xf32> to vector<8xf32>
    %28 = vector.shape_cast %27 : vector<8xf32> to vector<8x1xf32>
    %cst_22 = arith.constant 1.000000e-24 : f32
    %29 = vector.broadcast %cst_22 : f32 to vector<8x1xf32>
    %30 = arith.maximumf %28, %29 : vector<8x1xf32>
    %31 = math.rsqrt %30 : vector<8x1xf32>
    %32 = vector.broadcast %31 : vector<8x1xf32> to vector<8x128xf32>
    %33 = arith.mulf %25, %32 : vector<8x128xf32>
    %c0_23 = arith.constant 0 : index
    %c0_24 = arith.constant 0 : index
    %34 = vector.load %arg8[%c0_23, %c0_24] : memref<8x128xf32, #tpu.memory_space<vmem>>, vector<8x128xf32>
    tpu.vector_store %arg8[%c0_23, %c0_24], %33 {strides = array<i32>} : memref<8x128xf32, #tpu.memory_space<vmem>>, vector<8x128xf32>,
    return
  }
}

</mosaic_0001>

<llo_original>
// kernel: tpu_custom_call.1
$region0: #{tpu_custom_call.1}
  #allocation0 [shape = 'u32[]', space=smem, size = 0x4, offset = 0x4, fixed_abs, tag = 'smem constant byte address 0x4 - core index']
  #allocation1 [shape = 'u32[144,128]{1,0:T(1,128)}', space=vmem, size = 0x12000, scoped, tag = 'internal scratch']
  %s0 = inlined_call_operand.hbm [shape: f32[16,128], index: 0, kind: input, shape index: {}]
  %s1 = inlined_call_operand.hbm [shape: bf16[8,16], index: 1, kind: input, shape index: {}]
  %s2 = inlined_call_operand.vmem [shape: bf16[8,16], index: 2, kind: input, shape index: {}]
  %s3 = inlined_call_operand.hbm [shape: bf16[128,128], index: 3, kind: input, shape index: {}]
  %s4 = inlined_call_operand.vmem [shape: f32[1,128], index: 4, kind: input, shape index: {}]
  %s5 = inlined_call_operand.hbm [shape: bf16[128,128], index: 5, kind: input, shape index: {}]
  %s6 = inlined_call_operand.hbm [shape: bf16[128,128], index: 6, kind: input, shape index: {}]
  %s7 = inlined_call_operand.vmem [shape: f32[1,128], index: 7, kind: input, shape index: {}]
  %s8 = inlined_call_operand.hbm [shape: f32[8,128], index: 8, kind: output, shape index: {}]
  %s9 = sld [smem:[#allocation0]]
  $region62: #{tpu_custom_call.1} parent=0
    _
  %s11 = ssub.s32 1, %s9
  %s12 = scalar_select 0, %s11, %s9
  $region1: #{tpu_custom_call.1} parent=0
    #allocation2 [shape = 'u8[8192]{0}', space=vmem, size = 0x2000, scoped, tag = 'input window, operand 0, single buffered']
    #allocation3 [shape = 's32[1]{0}', space=sflag, size = 0x4, scoped, tag = 'scoped memory for tpu_custom_call.1']
    #allocation4 [shape = 's32[1]{0}', space=sflag, size = 0x4, scoped, tag = 'scoped memory for tpu_custom_call.1']
    #allocation5 [shape = 'u8[2048]{0}', space=vmem, size = 0x800, scoped, tag = 'input window, operand 1, single buffered']
    #allocation6 [shape = 's32[1]{0}', space=sflag, size = 0x4, scoped, tag = 'scoped memory for tpu_custom_call.1']
    #allocation7 [shape = 'u8[32768]{0}', space=vmem, size = 0x8000, scoped, tag = 'input window, operand 3, single buffered']
    #allocation8 [shape = 'u8[32768]{0}', space=vmem, size = 0x8000, scoped, tag = 'input window, operand 5, single buffered']
    #allocation9 [shape = 's32[1]{0}', space=sflag, size = 0x4, scoped, tag = 'scoped memory for tpu_custom_call.1']
    #allocation10 [shape = 'u8[32768]{0}', space=vmem, size = 0x8000, scoped, tag = 'input window, operand 6, single buffered']
    #allocation11 [shape = 'u8[4096]{0}', space=vmem, size = 0x1000, scoped, tag = 'output window, operand 0, single buffered']
    %13 = vsyncpa [#allocation3], 0
    %14 = vsyncpa [#allocation6], 0
    %15 = vsyncpa [#allocation9], 0
    %16 = vsyncpa [#allocation4], 0
    // Predicated region
    $region2: #{tpu_custom_call.1} parent=1 // pred_check
      _
    $region3: #{tpu_custom_call.1} parent=1 // pred_check_branch
      %18 = sbr.rel (0) target = $region5
    $region4: #{tpu_custom_call.1} parent=1 // pred_region
      %s20 = ssub.s32 256, 256
      %21 = vsyncadd [#allocation3], %s20
      %s22 = sshll.u32 [#allocation2], 4
      %s23 = int_to_ptr.vmem [resolvable:$true] %s22
      %28 = dma.hbm_to_vmem [thread:$0]  %s0, 256, %s23, [#allocation3], 128, 128, 8
    $region5: #{tpu_custom_call.1} parent=1 // pred_fallthru
      _
    // Predicated region
    $region6: #{tpu_custom_call.1} parent=1 // pred_check
      _
    $region7: #{tpu_custom_call.1} parent=1 // pred_check_branch
      %30 = sbr.rel (0) target = $region9
    $region8: #{tpu_custom_call.1} parent=1 // pred_region
      %s32 = ssub.s32 64, 64
      %33 = vsyncadd [#allocation6], %s32
      %s35 = sshll.u32 [#allocation5], 4
      %s36 = int_to_ptr.vmem [resolvable:$true] %s35
      %38 = dma.hbm_to_vmem [thread:$0]  %s1, 64, %s36, [#allocation6]
    $region9: #{tpu_custom_call.1} parent=1 // pred_fallthru
      _
    // Predicated region
    $region10: #{tpu_custom_call.1} parent=1 // pred_check
      _
    $region11: #{tpu_custom_call.1} parent=1 // pred_check_branch
      %40 = sbr.rel (0) target = $region13
    $region12: #{tpu_custom_call.1} parent=1 // pred_region
      _
    $region13: #{tpu_custom_call.1} parent=1 // pred_fallthru
      _
    // Predicated region
    $region14: #{tpu_custom_call.1} parent=1 // pred_check
      _
    $region15: #{tpu_custom_call.1} parent=1 // pred_check_branch
      %42 = sbr.rel (0) target = $region17
    $region16: #{tpu_custom_call.1} parent=1 // pred_region
      %s44 = ssub.s32 1024, 1024
      %45 = vsyncadd [#allocation6], %s44
      %s46 = sshll.u32 [#allocation7], 4
      %s47 = int_to_ptr.vmem [resolvable:$true] %s46
      %52 = dma.hbm_to_vmem [thread:$0]  %s3, 1024, %s47, [#allocation6], 64, 64, 4
    $region17: #{tpu_custom_call.1} parent=1 // pred_fallthru
      _
    // Predicated region
    $region18: #{tpu_custom_call.1} parent=1 // pred_check
      _
    $region19: #{tpu_custom_call.1} parent=1 // pred_check_branch
      %54 = sbr.rel (0) target = $region21
    $region20: #{tpu_custom_call.1} parent=1 // pred_region
      _
    $region21: #{tpu_custom_call.1} parent=1 // pred_fallthru
      _
    // Predicated region
    $region22: #{tpu_custom_call.1} parent=1 // pred_check
      _
    $region23: #{tpu_custom_call.1} parent=1 // pred_check_branch
      %56 = sbr.rel (0) target = $region25
    $region24: #{tpu_custom_call.1} parent=1 // pred_region
      %s58 = ssub.s32 1024, 1024
      %59 = vsyncadd [#allocation9], %s58
      %s60 = sshll.u32 [#allocation8], 4
      %s61 = int_to_ptr.vmem [resolvable:$true] %s60
      %66 = dma.hbm_to_vmem [thread:$0]  %s5, 1024, %s61, [#allocation9], 64, 64, 4
    $region25: #{tpu_custom_call.1} parent=1 // pred_fallthru
      _
    // Predicated region
    $region26: #{tpu_custom_call.1} parent=1 // pred_check
      _
    $region27: #{tpu_custom_call.1} parent=1 // pred_check_branch
      %68 = sbr.rel (0) target = $region29
    $region28: #{tpu_custom_call.1} parent=1 // pred_region
      %s70 = ssub.s32 1024, 1024
      %71 = vsyncadd [#allocation9], %s70
      %s72 = sshll.u32 [#allocation10], 4
      %s73 = int_to_ptr.vmem [resolvable:$true] %s72
      %78 = dma.hbm_to_vmem [thread:$0]  %s6, 1024, %s73, [#allocation9], 64, 64, 4
    $region29: #{tpu_custom_call.1} parent=1 // pred_fallthru
      _
    // Predicated region
    $region30: #{tpu_custom_call.1} parent=1 // pred_check
      _
    $region31: #{tpu_custom_call.1} parent=1 // pred_check_branch
      %80 = sbr.rel (0) target = $region33
    $region32: #{tpu_custom_call.1} parent=1 // pred_region
      _
    $region33: #{tpu_custom_call.1} parent=1 // pred_fallthru
      _
    // Predicated region
    $region34: #{tpu_custom_call.1} parent=1 // pred_check
      _
    $region35: #{tpu_custom_call.1} parent=1 // pred_check_branch
      %82 = sbr.rel (0) target = $region37
    $region36: #{tpu_custom_call.1} parent=1 // pred_region
      %83 = dma.done [#allocation3], 256
    $region37: #{tpu_custom_call.1} parent=1 // pred_fallthru
      _
    // Predicated region
    $region38: #{tpu_custom_call.1} parent=1 // pred_check
      _
    $region39: #{tpu_custom_call.1} parent=1 // pred_check_branch
      %85 = sbr.rel (0) target = $region41
    $region40: #{tpu_custom_call.1} parent=1 // pred_region
      %86 = dma.done [#allocation6], 64
    $region41: #{tpu_custom_call.1} parent=1 // pred_fallthru
      _
    // Predicated region
    $region42: #{tpu_custom_call.1} parent=1 // pred_check
      _
    $region43: #{tpu_custom_call.1} parent=1 // pred_check_branch
      %88 = sbr.rel (0) target = $region45
    $region44: #{tpu_custom_call.1} parent=1 // pred_region
      %89 = dma.done [#allocation6], 1024
    $region45: #{tpu_custom_call.1} parent=1 // pred_fallthru
      _
    // Predicated region
    $region46: #{tpu_custom_call.1} parent=1 // pred_check
      _
    $region47: #{tpu_custom_call.1} parent=1 // pred_check_branch
      %91 = sbr.rel (0) target = $region49
    $region48: #{tpu_custom_call.1} parent=1 // pred_region
      %92 = dma.done [#allocation9], 1024
    $region49: #{tpu_custom_call.1} parent=1 // pred_fallthru
      _
    // Predicated region
    $region50: #{tpu_custom_call.1} parent=1 // pred_check
      _
    $region51: #{tpu_custom_call.1} parent=1 // pred_check_branch
      %94 = sbr.rel (0) target = $region53
    $region52: #{tpu_custom_call.1} parent=1 // pred_region
      %95 = dma.done [#allocation9], 1024
    $region53: #{tpu_custom_call.1} parent=1 // pred_fallthru
      _
    %v97 = vld [vmem:[#allocation2] sm:$0xff]
    %v98 = vld [vmem:[#allocation2 + $0x8] sm:$0xff]
    %v99 = vpack.c.bf16 %v98, %v97
    %v100 = vld [vmem:[#allocation7] sm:$0xf]
    %v101 = vld [vmem:[#allocation7 + $0x4] sm:$0xf]
    %v102 = vld [vmem:[#allocation7 + $0x8] sm:$0xf]
    %v103 = vld [vmem:[#allocation7 + $0xc] sm:$0xf]
    %v104 = vld [vmem:[#allocation7 + $0x10] sm:$0xf]
    %v105 = vld [vmem:[#allocation7 + $0x14] sm:$0xf]
    %v106 = vld [vmem:[#allocation7 + $0x18] sm:$0xf]
    %v107 = vld [vmem:[#allocation7 + $0x1c] sm:$0xf]
    %v108 = vld [vmem:[#allocation7 + $0x20] sm:$0xf]
    %v109 = vld [vmem:[#allocation7 + $0x24] sm:$0xf]
    %v110 = vld [vmem:[#allocation7 + $0x28] sm:$0xf]
    %v111 = vld [vmem:[#allocation7 + $0x2c] sm:$0xf]
    %v112 = vld [vmem:[#allocation7 + $0x30] sm:$0xf]
    %v113 = vld [vmem:[#allocation7 + $0x34] sm:$0xf]
    %v114 = vld [vmem:[#allocation7 + $0x38] sm:$0xf]
    %v115 = vld [vmem:[#allocation7 + $0x3c] sm:$0xf]
    %v116 = vld [vmem:[%s4] sm:$0x1]
    %v118 = vlaneseq
    %v119 = vshrl.u32 %v118, 7
    %v120 = vsub.s32 0, %v119
    %v121 = vrot.slane %v116, %v120
    %v139 = vunpack.c.l.b16 %v100
    %v140 = vunpack.c.l.b16 %v101
    %v141 = vunpack.c.l.b16 %v102
    %v142 = vunpack.c.l.b16 %v103
    %v143 = vunpack.c.l.b16 %v104
    %v144 = vunpack.c.l.b16 %v105
    %v145 = vunpack.c.l.b16 %v106
    %v146 = vunpack.c.l.b16 %v107
    %v147 = vunpack.c.l.b16 %v108
    %v148 = vunpack.c.l.b16 %v109
    %v149 = vunpack.c.l.b16 %v110
    %v150 = vunpack.c.l.b16 %v111
    %v151 = vunpack.c.l.b16 %v112
    %v152 = vunpack.c.l.b16 %v113
    %v153 = vunpack.c.l.b16 %v114
    %v154 = vunpack.c.l.b16 %v115
    %v155 = vpack.c.b16 %v140, %v139
    %v156 = vpack.c.b16 %v142, %v141
    %v157 = vpack.c.b16 %v144, %v143
    %v158 = vpack.c.b16 %v146, %v145
    %v159 = vpack.c.b16 %v148, %v147
    %v160 = vpack.c.b16 %v150, %v149
    %v161 = vpack.c.b16 %v152, %v151
    %v162 = vpack.c.b16 %v154, %v153
    %171 = vmatprep.subr.bf16.mxu0 0
    %172 = vmatpush1.bf16.msra.mxu0 %v155
    %173 = vmatprep.subr.bf16.mxu0 0
    %174 = vmatpush1.bf16.msra.mxu0 %v156
    %175 = vmatprep.subr.bf16.mxu0 0
    %176 = vmatpush1.bf16.msra.mxu0 %v157
    %177 = vmatprep.subr.bf16.mxu0 0
    %178 = vmatpush1.bf16.msra.mxu0 %v158
    %179 = vmatprep.subr.bf16.mxu0 0
    %180 = vmatpush1.bf16.msra.mxu0 %v159
    %181 = vmatprep.subr.bf16.mxu0 0
    %182 = vmatpush1.bf16.msra.mxu0 %v160
    %183 = vmatprep.subr.bf16.mxu0 0
    %184 = vmatpush1.bf16.msra.mxu0 %v161
    %185 = vmatprep.subr.bf16.mxu0 0
    %186 = vmatpush1.bf16.msra.mxu0 %v162
    %187 = vmatprep.subr.bf16.mxu0 0
    %188 = vmatpush1.bf16.msra.mxu0 0
    %189 = vmatprep.subr.bf16.mxu0 0
    %190 = vmatpush1.bf16.msra.mxu0 0
    %191 = vmatprep.subr.bf16.mxu0 0
    %192 = vmatpush1.bf16.msra.mxu0 0
    %193 = vmatprep.subr.bf16.mxu0 0
    %194 = vmatpush1.bf16.msra.mxu0 0
    %195 = vmatprep.subr.bf16.mxu0 0
    %196 = vmatpush1.bf16.msra.mxu0 0
    %197 = vmatprep.subr.bf16.mxu0 0
    %198 = vmatpush1.bf16.msra.mxu0 0
    %199 = vmatprep.subr.bf16.mxu0 0
    %200 = vmatpush1.bf16.msra.mxu0 0
    %201 = vmatprep.subr.bf16.mxu0 0
    %202 = vmatpush1.bf16.msra.mxu0 0
    %203 = vmatprep.mubr.bf16.mxu0 0
    %204 = vmatmul.mubr.bf16.gmra.mrb[0].mxu0 %v99
    %v205 = vpop.f32.mrb[0].mxu0
    %v206 = vadd.f32 %v121, %v205
    %v207 = vpop.f32.mrb[0].mxu0
    %v208 = vpop.f32.mrb[0].mxu0
    %v209 = vadd.f32 %v121, %v208
    %v210 = vpop.f32.mrb[0].mxu0
    %211 = vdwg.mxu0
    %v212 = vmax.f32 %v206, 0.0
    %v213 = vmax.f32 %v209, 0.0
    %v214 = vld [vmem:[#allocation5] sm:$0xf]
    %v215 = vpack.c.bf16 %v213, %v212
    %vm216 = vcmask 130048
    %v218 = vsel %vm216, %v214, 0
    %220 = vmatprep.subr.bf16.mxu0 0
    %221 = vmatpush1.bf16.msra.mxu0 %v215
    %222 = vmatprep.subr.bf16.mxu0 0
    %223 = vmatpush1.bf16.msra.mxu0 0
    %224 = vmatprep.subr.bf16.mxu0 0
    %225 = vmatpush1.bf16.msra.mxu0 0
    %226 = vmatprep.subr.bf16.mxu0 0
    %227 = vmatpush1.bf16.msra.mxu0 0
    %228 = vmatprep.subr.bf16.mxu0 0
    %229 = vmatpush1.bf16.msra.mxu0 0
    %230 = vmatprep.subr.bf16.mxu0 0
    %231 = vmatpush1.bf16.msra.mxu0 0
    %232 = vmatprep.subr.bf16.mxu0 0
    %233 = vmatpush1.bf16.msra.mxu0 0
    %234 = vmatprep.subr.bf16.mxu0 0
    %235 = vmatpush1.bf16.msra.mxu0 0
    %236 = vmatprep.subr.bf16.mxu0 0
    %237 = vmatpush1.bf16.msra.mxu0 0
    %238 = vmatprep.subr.bf16.mxu0 0
    %239 = vmatpush1.bf16.msra.mxu0 0
    %240 = vmatprep.subr.bf16.mxu0 0
    %241 = vmatpush1.bf16.msra.mxu0 0
    %242 = vmatprep.subr.bf16.mxu0 0
    %243 = vmatpush1.bf16.msra.mxu0 0
    %244 = vmatprep.subr.bf16.mxu0 0
    %245 = vmatpush1.bf16.msra.mxu0 0
    %246 = vmatprep.subr.bf16.mxu0 0
    %247 = vmatpush1.bf16.msra.mxu0 0
    %248 = vmatprep.subr.bf16.mxu0 0
    %249 = vmatpush1.bf16.msra.mxu0 0
    %250 = vmatprep.subr.bf16.mxu0 0
    %251 = vmatpush1.bf16.msra.mxu0 0
    %252 = vmatprep.mubr.bf16.mxu0 0
    %253 = vmatmul.mubr.bf16.gmra.mrb[0].mxu0 %v218
    %v254 = vpop.f32.mrb[0].mxu0
    %v255 = vadd.f32 0.0, %v254
    %v256 = vpop.f32.mrb[0].mxu0
    %v257 = vpop.f32.mrb[0].mxu0
    %v258 = vpop.f32.mrb[0].mxu0
    %259 = vdwg.mxu0
    %v260 = vld [vmem:[%s2] sm:$0xf]
    %v262 = vsel %vm216, %v260, 0
    %264 = vmatprep.subr.bf16.mxu0 0
    %265 = vmatpush1.bf16.msra.mxu0 %v99
    %266 = vmatprep.subr.bf16.mxu0 0
    %267 = vmatpush1.bf16.msra.mxu0 0
    %268 = vmatprep.subr.bf16.mxu0 0
    %269 = vmatpush1.bf16.msra.mxu0 0
    %270 = vmatprep.subr.bf16.mxu0 0
    %271 = vmatpush1.bf16.msra.mxu0 0
    %272 = vmatprep.subr.bf16.mxu0 0
    %273 = vmatpush1.bf16.msra.mxu0 0
    %274 = vmatprep.subr.bf16.mxu0 0
    %275 = vmatpush1.bf16.msra.mxu0 0
    %276 = vmatprep.subr.bf16.mxu0 0
    %277 = vmatpush1.bf16.msra.mxu0 0
    %278 = vmatprep.subr.bf16.mxu0 0
    %279 = vmatpush1.bf16.msra.mxu0 0
    %280 = vmatprep.subr.bf16.mxu0 0
    %281 = vmatpush1.bf16.msra.mxu0 0
    %282 = vmatprep.subr.bf16.mxu0 0
    %283 = vmatpush1.bf16.msra.mxu0 0
    %284 = vmatprep.subr.bf16.mxu0 0
    %285 = vmatpush1.bf16.msra.mxu0 0
    %286 = vmatprep.subr.bf16.mxu0 0
    %287 = vmatpush1.bf16.msra.mxu0 0
    %288 = vmatprep.subr.bf16.mxu0 0
    %289 = vmatpush1.bf16.msra.mxu0 0
    %290 = vmatprep.subr.bf16.mxu0 0
    %291 = vmatpush1.bf16.msra.mxu0 0
    %292 = vmatprep.subr.bf16.mxu0 0
    %293 = vmatpush1.bf16.msra.mxu0 0
    %294 = vmatprep.subr.bf16.mxu0 0
    %295 = vmatpush1.bf16.msra.mxu0 0
    %296 = vmatprep.mubr.bf16.mxu0 0
    %297 = vmatmul.mubr.bf16.gmra.mrb[0].mxu0 %v262
    %v298 = vpop.f32.mrb[0].mxu0
    %v299 = vadd.f32 0.0, %v298
    %v300 = vpop.f32.mrb[0].mxu0
    %v301 = vpop.f32.mrb[0].mxu0
    %v302 = vpop.f32.mrb[0].mxu0
    %303 = vdwg.mxu0
    %v304 = vpack.c.bf16 %v299, %v299
    %v305 = vld [vmem:[#allocation8] sm:$0xf]
    %v306 = vld [vmem:[#allocation8 + $0x4] sm:$0xf]
    %v307 = vld [vmem:[#allocation8 + $0x8] sm:$0xf]
    %v308 = vld [vmem:[#allocation8 + $0xc] sm:$0xf]
    %v309 = vld [vmem:[#allocation8 + $0x10] sm:$0xf]
    %v310 = vld [vmem:[#allocation8 + $0x14] sm:$0xf]
    %v311 = vld [vmem:[#allocation8 + $0x18] sm:$0xf]
    %v312 = vld [vmem:[#allocation8 + $0x1c] sm:$0xf]
    %v313 = vld [vmem:[#allocation8 + $0x20] sm:$0xf]
    %v314 = vld [vmem:[#allocation8 + $0x24] sm:$0xf]
    %v315 = vld [vmem:[#allocation8 + $0x28] sm:$0xf]
    %v316 = vld [vmem:[#allocation8 + $0x2c] sm:$0xf]
    %v317 = vld [vmem:[#allocation8 + $0x30] sm:$0xf]
    %v318 = vld [vmem:[#allocation8 + $0x34] sm:$0xf]
    %v319 = vld [vmem:[#allocation8 + $0x38] sm:$0xf]
    %v320 = vld [vmem:[#allocation8 + $0x3c] sm:$0xf]
    %v321 = vpack.c.bf16 %v255, %v255
    %v322 = vld [vmem:[#allocation10] sm:$0xf]
    %v323 = vld [vmem:[#allocation10 + $0x4] sm:$0xf]
    %v324 = vld [vmem:[#allocation10 + $0x8] sm:$0xf]
    %v325 = vld [vmem:[#allocation10 + $0xc] sm:$0xf]
    %v326 = vld [vmem:[#allocation10 + $0x10] sm:$0xf]
    %v327 = vld [vmem:[#allocation10 + $0x14] sm:$0xf]
    %v328 = vld [vmem:[#allocation10 + $0x18] sm:$0xf]
    %v329 = vld [vmem:[#allocation10 + $0x1c] sm:$0xf]
    %v330 = vld [vmem:[#allocation10 + $0x20] sm:$0xf]
    %v331 = vld [vmem:[#allocation10 + $0x24] sm:$0xf]
    %v332 = vld [vmem:[#allocation10 + $0x28] sm:$0xf]
    %v333 = vld [vmem:[#allocation10 + $0x2c] sm:$0xf]
    %v334 = vld [vmem:[#allocation10 + $0x30] sm:$0xf]
    %v335 = vld [vmem:[#allocation10 + $0x34] sm:$0xf]
    %v336 = vld [vmem:[#allocation10 + $0x38] sm:$0xf]
    %v337 = vld [vmem:[#allocation10 + $0x3c] sm:$0xf]
    %v354 = vunpack.c.l.b16 %v322
    %v355 = vunpack.c.l.b16 %v323
    %v356 = vunpack.c.l.b16 %v324
    %v357 = vunpack.c.l.b16 %v325
    %v358 = vunpack.c.l.b16 %v326
    %v359 = vunpack.c.l.b16 %v327
    %v360 = vunpack.c.l.b16 %v328
    %v361 = vunpack.c.l.b16 %v329
    %v362 = vunpack.c.l.b16 %v330
    %v363 = vunpack.c.l.b16 %v331
    %v364 = vunpack.c.l.b16 %v332
    %v365 = vunpack.c.l.b16 %v333
    %v366 = vunpack.c.l.b16 %v334
    %v367 = vunpack.c.l.b16 %v335
    %v368 = vunpack.c.l.b16 %v336
    %v369 = vunpack.c.l.b16 %v337
    %v370 = vpack.c.b16 %v355, %v354
    %v371 = vpack.c.b16 %v357, %v356
    %v372 = vpack.c.b16 %v359, %v358
    %v373 = vpack.c.b16 %v361, %v360
    %v374 = vpack.c.b16 %v363, %v362
    %v375 = vpack.c.b16 %v365, %v364
    %v376 = vpack.c.b16 %v367, %v366
    %v377 = vpack.c.b16 %v369, %v368
    %386 = vmatprep.subr.bf16.mxu0 0
    %387 = vmatpush1.bf16.msra.mxu0 %v370
    %388 = vmatprep.subr.bf16.mxu0 0
    %389 = vmatpush1.bf16.msra.mxu0 %v371
    %390 = vmatprep.subr.bf16.mxu0 0
    %391 = vmatpush1.bf16.msra.mxu0 %v372
    %392 = vmatprep.subr.bf16.mxu0 0
    %393 = vmatpush1.bf16.msra.mxu0 %v373
    %394 = vmatprep.subr.bf16.mxu0 0
    %395 = vmatpush1.bf16.msra.mxu0 %v374
    %396 = vmatprep.subr.bf16.mxu0 0
    %397 = vmatpush1.bf16.msra.mxu0 %v375
    %398 = vmatprep.subr.bf16.mxu0 0
    %399 = vmatpush1.bf16.msra.mxu0 %v376
    %400 = vmatprep.subr.bf16.mxu0 0
    %401 = vmatpush1.bf16.msra.mxu0 %v377
    %402 = vmatprep.subr.bf16.mxu0 0
    %403 = vmatpush1.bf16.msra.mxu0 0
    %404 = vmatprep.subr.bf16.mxu0 0
    %405 = vmatpush1.bf16.msra.mxu0 0
    %406 = vmatprep.subr.bf16.mxu0 0
    %407 = vmatpush1.bf16.msra.mxu0 0
    %408 = vmatprep.subr.bf16.mxu0 0
    %409 = vmatpush1.bf16.msra.mxu0 0
    %410 = vmatprep.subr.bf16.mxu0 0
    %411 = vmatpush1.bf16.msra.mxu0 0
    %412 = vmatprep.subr.bf16.mxu0 0
    %413 = vmatpush1.bf16.msra.mxu0 0
    %414 = vmatprep.subr.bf16.mxu0 0
    %415 = vmatpush1.bf16.msra.mxu0 0
    %416 = vmatprep.subr.bf16.mxu0 0
    %417 = vmatpush1.bf16.msra.mxu0 0
    %418 = vmatprep.mubr.bf16.mxu0 0
    %419 = vmatmul.mubr.bf16.gmra.mrb[0].mxu0 %v321
    %v420 = vpop.f32.mrb[0].mxu0
    %v421 = vadd.f32 0.0, %v420
    %v422 = vpop.f32.mrb[0].mxu0
    %v423 = vpop.f32.mrb[0].mxu0
    %v424 = vpop.f32.mrb[0].mxu0
    %425 = vdwg.mxu0
    %v442 = vunpack.c.l.b16 %v305
    %v443 = vunpack.c.l.b16 %v306
    %v444 = vunpack.c.l.b16 %v307
    %v445 = vunpack.c.l.b16 %v308
    %v446 = vunpack.c.l.b16 %v309
    %v447 = vunpack.c.l.b16 %v310
    %v448 = vunpack.c.l.b16 %v311
    %v449 = vunpack.c.l.b16 %v312
    %v450 = vunpack.c.l.b16 %v313
    %v451 = vunpack.c.l.b16 %v314
    %v452 = vunpack.c.l.b16 %v315
    %v453 = vunpack.c.l.b16 %v316
    %v454 = vunpack.c.l.b16 %v317
    %v455 = vunpack.c.l.b16 %v318
    %v456 = vunpack.c.l.b16 %v319
    %v457 = vunpack.c.l.b16 %v320
    %v458 = vpack.c.b16 %v443, %v442
    %v459 = vpack.c.b16 %v445, %v444
    %v460 = vpack.c.b16 %v447, %v446
    %v461 = vpack.c.b16 %v449, %v448
    %v462 = vpack.c.b16 %v451, %v450
    %v463 = vpack.c.b16 %v453, %v452
    %v464 = vpack.c.b16 %v455, %v454
    %v465 = vpack.c.b16 %v457, %v456
    %474 = vmatprep.subr.bf16.mxu0 0
    %475 = vmatpush1.bf16.msra.mxu0 %v458
    %476 = vmatprep.subr.bf16.mxu0 0
    %477 = vmatpush1.bf16.msra.mxu0 %v459
    %478 = vmatprep.subr.bf16.mxu0 0
    %479 = vmatpush1.bf16.msra.mxu0 %v460
    %480 = vmatprep.subr.bf16.mxu0 0
    %481 = vmatpush1.bf16.msra.mxu0 %v461
    %482 = vmatprep.subr.bf16.mxu0 0
    %483 = vmatpush1.bf16.msra.mxu0 %v462
    %484 = vmatprep.subr.bf16.mxu0 0
    %485 = vmatpush1.bf16.msra.mxu0 %v463
    %486 = vmatprep.subr.bf16.mxu0 0
    %487 = vmatpush1.bf16.msra.mxu0 %v464
    %488 = vmatprep.subr.bf16.mxu0 0
    %489 = vmatpush1.bf16.msra.mxu0 %v465
    %490 = vmatprep.subr.bf16.mxu0 0
    %491 = vmatpush1.bf16.msra.mxu0 0
    %492 = vmatprep.subr.bf16.mxu0 0
    %493 = vmatpush1.bf16.msra.mxu0 0
    %494 = vmatprep.subr.bf16.mxu0 0
    %495 = vmatpush1.bf16.msra.mxu0 0
    %496 = vmatprep.subr.bf16.mxu0 0
    %497 = vmatpush1.bf16.msra.mxu0 0
    %498 = vmatprep.subr.bf16.mxu0 0
    %499 = vmatpush1.bf16.msra.mxu0 0
    %500 = vmatprep.subr.bf16.mxu0 0
    %501 = vmatpush1.bf16.msra.mxu0 0
    %502 = vmatprep.subr.bf16.mxu0 0
    %503 = vmatpush1.bf16.msra.mxu0 0
    %504 = vmatprep.subr.bf16.mxu0 0
    %505 = vmatpush1.bf16.msra.mxu0 0
    %506 = vmatprep.mubr.bf16.mxu0 0
    %507 = vmatmul.mubr.bf16.gmra.mrb[0].mxu0 %v304
    %v508 = vpop.f32.mrb[0].mxu0
    %v509 = vadd.f32 %v421, %v508
    %v510 = vpop.f32.mrb[0].mxu0
    %v511 = vpop.f32.mrb[0].mxu0
    %v512 = vpop.f32.mrb[0].mxu0
    %513 = vdwg.mxu0
    %v514 = vld [vmem:[%s7] sm:$0x1]
    %v516 = vlaneseq
    %v517 = vshrl.u32 %v516, 7
    %v518 = vsub.s32 0, %v517
    %v519 = vrot.slane %v514, %v518
    %v521 = vadd.f32 %v509, %v519
    %v522 = vmax.f32 %v521, 0.0
    %v523 = vmul.f32 %v522, %v522
    %524 = vadd.xlane.f32.xlu0 %v523
    %v525 = vpop.xlane.xlu0 %524
    %v526 = vmax.f32 %v525, 1e-24
    %v527 = vrsqrt.pop %v526
    %v528 = vmul.f32 %v522, %v527
    %529 = vst [vmem:[#allocation11] sm:$0xff] %v528
    // Predicated region
    $region54: #{tpu_custom_call.1} parent=1 // pred_check
      _
    $region55: #{tpu_custom_call.1} parent=1 // pred_check_branch
      %531 = sbr.rel (0) target = $region57
    $region56: #{tpu_custom_call.1} parent=1 // pred_region
      %s533 = ssub.s32 128, 128
      %534 = vsyncadd [#allocation4], %s533
      %s536 = sshll.u32 [#allocation11], 4
      %s537 = int_to_ptr.vmem [resolvable:$true] %s536
      %539 = dma.vmem_to_hbm [thread:$0]  %s537, 128, %s8, [#allocation4]
    $region57: #{tpu_custom_call.1} parent=1 // pred_fallthru
      _
    // Predicated region
    $region58: #{tpu_custom_call.1} parent=1 // pred_check
      _
    $region59: #{tpu_custom_call.1} parent=1 // pred_check_branch
      %541 = sbr.rel (0) target = $region61
    $region60: #{tpu_custom_call.1} parent=1 // pred_region
      %542 = dma.done [#allocation4], 128
    $region61: #{tpu_custom_call.1} parent=1 // pred_fallthru
      _
    %543 = vsyncpa [#allocation3], 1
    %544 = vsyncpa [#allocation6], 1
    %545 = vsyncpa [#allocation9], 1
    %546 = vsyncpa [#allocation4], 1

</llo_original>
